<compile_context>
chip_gen: v7x
topology: tpu7x:2x2x1
jax: 0.10.0
libtpu: 0.0.40
codegen_flags: <defaults>
</compile_context>

<pallas_src>
import functools

import jax
import jax.numpy as jnp
from jax import lax
from jax.experimental import pallas as pl
from jax.experimental.pallas import tpu as pltpu


def _lsr(x, n):
    # Logical right shift for int32: arithmetic shift, then mask sign-extension.
    return jnp.bitwise_and(jnp.right_shift(x, n), jnp.int32((1 << (32 - n)) - 1))


def _pointer_network_kernel(
    enc_ref, dec_ref, ptr_ref, labels_ref,
    wq_ref, bq_ref, wk_ref, bk_ref,
    gamma_ref, beta_ref, seed_ref,
    new_dec_ref, logits_ref, ce_ref,
    *, drop_p,
):
    bstep = pl.program_id(0)

    enc = enc_ref[...]                       # (nb, Se, D) bf16
    dec = dec_ref[...]                       # (nb, Sd, D) f32
    nb, Sd, D = dec.shape
    Se = enc.shape[1]

    # ---- Linear projections folded over the whole batch block: one
    #      (nb*Sd, D) @ (D, D) and one (nb*Se, D) @ (D, D) MXU matmul
    #      (bf16 operands, f32 accumulate).  rsqrt(D) is folded into wq/bq.
    q = lax.dot_general(dec.astype(jnp.bfloat16).reshape(nb * Sd, D), wq_ref[...],
                        (((1,), (1,)), ((), ())),
                        preferred_element_type=jnp.float32) + bq_ref[...]   # (nb*Sd, D)
    k = lax.dot_general(enc.reshape(nb * Se, D), wk_ref[...],
                        (((1,), (1,)), ((), ())),
                        preferred_element_type=jnp.float32) + bk_ref[...]   # (nb*Se, D)

    # ---- pointer logits: batched (q * rsqrt(D)) @ k^T.
    q3 = q.reshape(nb, Sd, D).astype(jnp.bfloat16)
    k3 = k.reshape(nb, Se, D).astype(jnp.bfloat16)
    logits = lax.dot_general(q3, k3, (((2,), (2,)), ((0,), (0,))),
                             preferred_element_type=jnp.float32)            # (nb, Sd, Se)
    logits_ref[...] = logits

    # ---- per-position cross-entropy over the Se classes (no padded classes).
    labels = labels_ref[...]                                                # (nb, Sd, 1)
    m = jnp.max(logits, axis=-1, keepdims=True)
    lse = jnp.log(jnp.sum(jnp.exp(logits - m), axis=-1, keepdims=True)) + m
    cls_iota = lax.broadcasted_iota(jnp.int32, (nb, Sd, Se), 2)
    picked = jnp.sum(jnp.where(cls_iota == labels, logits, 0.0),
                     axis=-1, keepdims=True)                                # (nb, Sd, 1)
    ce_ref[...] = lse - picked

    # ---- pointer_out was gathered (torch.take semantics) in the wrapper.
    pointer_out = ptr_ref[...]                                              # (nb, Sd, 1)

    # ---- LayerNorm over the target_length (Sd) axis, eps = 1e-6 (module sets it).
    mu = jnp.mean(pointer_out, axis=1, keepdims=True)
    var = jnp.mean(jnp.square(pointer_out - mu), axis=1, keepdims=True)
    y = (pointer_out - mu) * lax.rsqrt(var + 1e-6)
    y = y * gamma_ref[...] + beta_ref[...]                                  # (nb, Sd, 1)

    # ---- dropout(p=0.2), training mode (F.dropout default training=True).
    # TODO(synk): in-kernel murmur-style hash PRNG reproduces Bernoulli(1-p)
    # + 1/(1-p) scaling but is not bit-identical to torch RNG streams.
    pos = ((lax.broadcasted_iota(jnp.int32, (nb, Sd, 1), 0) + bstep * nb) * Sd
           + lax.broadcasted_iota(jnp.int32, (nb, Sd, 1), 1))
    x = (pos + jnp.int32(1)) * jnp.int32(-1640531535) + seed_ref[0]
    x = jnp.bitwise_xor(x, _lsr(x, 16))
    x = x * jnp.int32(-2048144789)
    x = jnp.bitwise_xor(x, _lsr(x, 13))
    x = x * jnp.int32(-1028477387)
    x = jnp.bitwise_xor(x, _lsr(x, 16))
    u = jnp.bitwise_and(x, jnp.int32(0x7FFFFF)).astype(jnp.float32) * (1.0 / 8388608.0)
    keep = u >= jnp.float32(drop_p)
    y = jnp.where(keep, y * jnp.float32(1.0 / (1.0 - drop_p)), jnp.float32(0.0))

    # ---- residual: y.unsqueeze(-1) + decoder_output.
    new_dec_ref[...] = y + dec


def _ceil_to(n, m):
    return ((n + m - 1) // m) * m


def _tile_bytes(shape, itemsize):
    s = list(shape)
    s[-1] = _ceil_to(s[-1], 128)
    if len(s) >= 2:
        s[-2] = _ceil_to(s[-2], 8)
    n = 1
    for d in s:
        n *= d
    return n * itemsize


def _vmem_cap_bytes():
    # Generation-aware physical VMEM (v5e/v6e: 128 MiB, v7x: 64 MiB per core).
    try:
        info = pltpu.get_tpu_info()
        for attr in ("vmem_capacity_bytes", "vmem_size_bytes", "vmem_bytes"):
            v = getattr(info, attr, None)
            if v:
                return int(v)
    except Exception:
        pass
    return 64 << 20      # conservative fallback: assume v7x


def pointer_network_forward(encoder_output, decoder_output, labels, params,
                            seed=0, drop_p=0.2):
    encoder_output = encoder_output.astype(jnp.float32)
    decoder_output = decoder_output.astype(jnp.float32)
    labels = labels.astype(jnp.int32)

    B, Se, D = encoder_output.shape
    _, Sd, _ = decoder_output.shape

    # gather_nd / torch.take on the flattened encoder (flat idx = b*Se + label),
    # done once in the wrapper as an exact-f32 XLA gather.
    flat_idx = jnp.arange(B, dtype=jnp.int32)[:, None] * Se + labels            # (B, Sd)
    pointer_out = jnp.take(encoder_output.reshape(-1), flat_idx)                # (B, Sd)

    # Encoder ships to the kernel as bf16; decoder stays f32 for the residual.
    enc_bf = encoder_output.astype(jnp.bfloat16)

    # ---- batch blocking: nb batch elements per grid step, capped by the
    #      generation-aware VMEM budget and by nb*Sd ~ 256 (MXU M-dim fill).
    cap = _vmem_cap_bytes()
    per_b = (_tile_bytes((Se, D), 2)             # enc (bf16)
             + 2 * _tile_bytes((Sd, D), 4)       # dec in + new_dec out
             + _tile_bytes((Sd, Se), 4)          # logits out
             + 3 * _tile_bytes((Sd, 1), 4))      # ptr / labels / ce
    budget = max(cap // 2, cap - (16 << 20))
    max_nb = max(1, budget // (2 * per_b))       # double-buffered pipeline
    target_nb = max(1, -(-256 // max(Sd, 1)))
    nb = int(max(1, min(B, target_nb, max_nb)))

    n_steps = -(-B // nb)
    B_pad = n_steps * nb
    if B_pad != B:
        p = B_pad - B
        enc_bf = jnp.pad(enc_bf, ((0, p), (0, 0), (0, 0)))
        decoder_in = jnp.pad(decoder_output, ((0, p), (0, 0), (0, 0)))
        pointer_out = jnp.pad(pointer_out, ((0, p), (0, 0)))
        labels_in = jnp.pad(labels, ((0, p), (0, 0)))
    else:
        decoder_in = decoder_output
        labels_in = labels

    ptr3 = pointer_out.reshape(B_pad, Sd, 1)
    labels3 = labels_in.reshape(B_pad, Sd, 1)

    # Fold rsqrt(D) into the query projection (one-time weight transform).
    scale = lax.rsqrt(jnp.float32(D))
    wq = (params["wq"].astype(jnp.float32) * scale).astype(jnp.bfloat16)        # (D, D) [out, in]
    bq = (params["bq"].astype(jnp.float32) * scale).reshape(1, D)
    wk = params["wk"].astype(jnp.bfloat16)
    bk = params["bk"].astype(jnp.float32).reshape(1, D)
    gamma = params["gamma"].astype(jnp.float32).reshape(Sd, 1)
    beta = params["beta"].astype(jnp.float32).reshape(Sd, 1)
    seed_arr = jnp.array([seed], dtype=jnp.int32)

    bmap = lambda i: (i, 0, 0)
    cmap2 = lambda i: (0, 0)

    # TODO(synk): the constant-index-map inputs could use pipeline_mode=pl.Buffered(1)
    # to drop their second VMEM copy; skipped to keep lowering maximally portable.
    in_specs = [
        pl.BlockSpec((nb, Se, D), bmap),                          # encoder block (bf16)
        pl.BlockSpec((nb, Sd, D), bmap),                          # decoder block (f32)
        pl.BlockSpec((nb, Sd, 1), bmap),                          # pointer_out (gathered)
        pl.BlockSpec((nb, Sd, 1), bmap),                          # labels
        pl.BlockSpec((D, D), cmap2),                              # wq (bf16, scaled)
        pl.BlockSpec((1, D), cmap2),                              # bq (f32, scaled)
        pl.BlockSpec((D, D), cmap2),                              # wk (bf16)
        pl.BlockSpec((1, D), cmap2),                              # bk
        pl.BlockSpec((Sd, 1), cmap2),                             # gamma
        pl.BlockSpec((Sd, 1), cmap2),                             # beta
        pl.BlockSpec(memory_space=pltpu.MemorySpace.SMEM),        # seed (scalar)
    ]
    out_specs = (
        pl.BlockSpec((nb, Sd, D), bmap),                          # new decoder_output
        pl.BlockSpec((nb, Sd, Se), bmap),                         # logits (unpadded, no post-slice)
        pl.BlockSpec((nb, Sd, 1), bmap),                          # per-position CE
    )
    out_shapes = (
        jax.ShapeDtypeStruct((B_pad, Sd, D), jnp.float32),
        jax.ShapeDtypeStruct((B_pad, Sd, Se), jnp.float32),
        jax.ShapeDtypeStruct((B_pad, Sd, 1), jnp.float32),
    )

    resident = (2 * _tile_bytes((D, D), 2) + 2 * _tile_bytes((1, D), 4)
                + 2 * _tile_bytes((Sd, 1), 4))
    per_step = nb * per_b
    vmem_limit = int(max(min(2 * per_step + resident + (8 << 20), cap - (8 << 20)),
                         min(32 << 20, cap - (8 << 20))))

    kernel = functools.partial(_pointer_network_kernel, drop_p=drop_p)

    new_dec, logits, ce = pl.pallas_call(
        kernel,
        out_shape=out_shapes,
        grid=(n_steps,),
        in_specs=in_specs,
        out_specs=out_specs,
        compiler_params=pltpu.CompilerParams(
            dimension_semantics=("parallel",),
            vmem_limit_bytes=vmem_limit),
    )(enc_bf, decoder_in, ptr3, labels3, wq, bq, wk, bk, gamma, beta, seed_arr)

    if B_pad != B:
        new_dec = new_dec[:B]
        logits = logits[:B]
        ce = ce[:B]
    # CrossEntropyLoss reduction='mean' over all B*Sd positions.
    loss = jnp.mean(ce)
    return new_dec, logits, loss


def init_params(key, target_length, dim):
    # Synthetic init matching the module's parameter shapes:
    #   encoder_dense / decoder_dense: Linear(dim, dim) -> W (dim, dim), b (dim,)
    #   ln_y: LayerNorm([target_length]) -> gamma/beta (target_length,)
    k1, k2, k3, k4 = jax.random.split(key, 4)
    bound = 1.0 / (dim ** 0.5)
    return dict(
        wq=jax.random.uniform(k1, (dim, dim), jnp.float32, -bound, bound),
        bq=jax.random.uniform(k2, (dim,), jnp.float32, -bound, bound),
        wk=jax.random.uniform(k3, (dim, dim), jnp.float32, -bound, bound),
        bk=jax.random.uniform(k4, (dim,), jnp.float32, -bound, bound),
        gamma=jnp.ones((target_length,), jnp.float32),
        beta=jnp.zeros((target_length,), jnp.float32),
    )


# TODO(synk): the module's generation branch (encoder_output is None path using
# tagmodel_cache / AutoConfig('microsoft/codebert-base')) depends on an external
# HF model and is not representable as a Pallas kernel; only the training
# forward is implemented.

if __name__ == "__main__":
    # Small shapes: batch=2, encoder seq=16, target_length (decoder seq)=8, dim=32
    B, Se, Sd, D = 2, 16, 8, 32
    key = jax.random.PRNGKey(0)
    k_enc, k_dec, k_lab, k_par = jax.random.split(key, 4)

    encoder_output = jax.random.normal(k_enc, (B, Se, D), jnp.float32)
    decoder_output = jax.random.normal(k_dec, (B, Sd, D), jnp.float32)
    labels = jax.random.randint(k_lab, (B, Sd), 0, Se, jnp.int32)
    params = init_params(k_par, target_length=Sd, dim=D)

    new_dec, logits, loss = pointer_network_forward(
        encoder_output, decoder_output, labels, params, seed=0)
    jax.block_until_ready((new_dec, logits, loss))
    print("KERNEL_OK")
</pallas_src>

<mosaic_0001>
module attributes {stable_mosaic.version = 11 : i64} {
  func.func @_pointer_network_kernel(%arg0: i32, %arg1: memref<2x16x32xbf16, #tpu.memory_space<vmem>>, %arg2: memref<2x8x32xf32, #tpu.memory_space<vmem>>, %arg3: memref<2x8x1xf32, #tpu.memory_space<vmem>>, %arg4: memref<2x8x1xi32, #tpu.memory_space<vmem>>, %arg5: memref<32x32xbf16, #tpu.memory_space<vmem>>, %arg6: memref<1x32xf32, #tpu.memory_space<vmem>>, %arg7: memref<32x32xbf16, #tpu.memory_space<vmem>>, %arg8: memref<1x32xf32, #tpu.memory_space<vmem>>, %arg9: memref<8x1xf32, #tpu.memory_space<vmem>>, %arg10: memref<8x1xf32, #tpu.memory_space<vmem>>, %arg11: memref<1xi32, #tpu.memory_space<smem>>, %arg12: memref<2x8x32xf32, #tpu.memory_space<vmem>>, %arg13: memref<2x8x16xf32, #tpu.memory_space<vmem>>, %arg14: memref<2x8x1xf32, #tpu.memory_space<vmem>>) attributes {dimension_semantics = [#tpu.dimension_semantics<parallel>], iteration_bounds = array<i64: 1>, scalar_prefetch = 0 : i64, scratch_operands = 0 : i64, tpu.core_type = #tpu.core_type<tc>, window_params = [{transform_indices = @transform_0, window_bounds = array<i64: 2, 16, 32>}, {transform_indices = @transform_1, window_bounds = array<i64: 2, 8, 32>}, {transform_indices = @transform_2, window_bounds = array<i64: 2, 8, 1>}, {transform_indices = @transform_3, window_bounds = array<i64: 2, 8, 1>}, {pipeline_mode = #tpu.pipeline_mode<synchronous>, transform_indices = @transform_4, window_bounds = array<i64: 32, 32>}, {pipeline_mode = #tpu.pipeline_mode<synchronous>, transform_indices = @transform_5, window_bounds = array<i64: 1, 32>}, {pipeline_mode = #tpu.pipeline_mode<synchronous>, transform_indices = @transform_6, window_bounds = array<i64: 32, 32>}, {pipeline_mode = #tpu.pipeline_mode<synchronous>, transform_indices = @transform_7, window_bounds = array<i64: 1, 32>}, {pipeline_mode = #tpu.pipeline_mode<synchronous>, transform_indices = @transform_8, window_bounds = array<i64: 8, 1>}, {pipeline_mode = #tpu.pipeline_mode<synchronous>, transform_indices = @transform_9, window_bounds = array<i64: 8, 1>}, {transform_indices = @transform_10, window_bounds = array<i64: 1>}, {transform_indices = @transform_11, window_bounds = array<i64: 2, 8, 32>}, {transform_indices = @transform_12, window_bounds = array<i64: 2, 8, 16>}, {transform_indices = @transform_13, window_bounds = array<i64: 2, 8, 1>}]} {
    %c0 = arith.constant 0 : index
    %c0_0 = arith.constant 0 : index
    %c0_1 = arith.constant 0 : index
    %0 = vector.load %arg1[%c0, %c0_0, %c0_1] : memref<2x16x32xbf16, #tpu.memory_space<vmem>>, vector<2x16x32xbf16>
    %c0_2 = arith.constant 0 : index
    %c0_3 = arith.constant 0 : index
    %c0_4 = arith.constant 0 : index
    %1 = vector.load %arg2[%c0_2, %c0_3, %c0_4] : memref<2x8x32xf32, #tpu.memory_space<vmem>>, vector<2x8x32xf32>
    %2 = arith.truncf %1 : vector<2x8x32xf32> to vector<2x8x32xbf16>
    %3 = vector.shape_cast %2 : vector<2x8x32xbf16> to vector<16x32xbf16>
    %c0_5 = arith.constant 0 : index
    %c0_6 = arith.constant 0 : index
    %4 = vector.load %arg5[%c0_5, %c0_6] : memref<32x32xbf16, #tpu.memory_space<vmem>>, vector<32x32xbf16>
    %cst = arith.constant dense<0.000000e+00> : vector<16x32xf32>
    %5 = tpu.matmul %3, %4, %cst {dimension_numbers = #tpu.dot_dimension_numbers<[1], [1], [0], [0], [0, 0, 1, 0], [], []>} : vector<16x32xbf16>, vector<32x32xbf16>, vector<16x32xf32> -> vector<16x32xf32>
    %c0_7 = arith.constant 0 : index
    %c0_8 = arith.constant 0 : index
    %6 = vector.load %arg6[%c0_7, %c0_8] : memref<1x32xf32, #tpu.memory_space<vmem>>, vector<1x32xf32>
    %7 = vector.broadcast %6 : vector<1x32xf32> to vector<16x32xf32>
    %8 = arith.addf %5, %7 : vector<16x32xf32>
    %9 = vector.shape_cast %0 : vector<2x16x32xbf16> to vector<32x32xbf16>
    %c0_9 = arith.constant 0 : index
    %c0_10 = arith.constant 0 : index
    %10 = vector.load %arg7[%c0_9, %c0_10] : memref<32x32xbf16, #tpu.memory_space<vmem>>, vector<32x32xbf16>
    %cst_11 = arith.constant dense<0.000000e+00> : vector<32x32xf32>
    %11 = tpu.matmul %9, %10, %cst_11 {dimension_numbers = #tpu.dot_dimension_numbers<[1], [1], [0], [0], [0, 0, 1, 0], [], []>} : vector<32x32xbf16>, vector<32x32xbf16>, vector<32x32xf32> -> vector<32x32xf32>
    %c0_12 = arith.constant 0 : index
    %c0_13 = arith.constant 0 : index
    %12 = vector.load %arg8[%c0_12, %c0_13] : memref<1x32xf32, #tpu.memory_space<vmem>>, vector<1x32xf32>
    %13 = vector.broadcast %12 : vector<1x32xf32> to vector<32x32xf32>
    %14 = arith.addf %11, %13 : vector<32x32xf32>
    %15 = vector.shape_cast %8 : vector<16x32xf32> to vector<2x8x32xf32>
    %16 = arith.truncf %15 : vector<2x8x32xf32> to vector<2x8x32xbf16>
    %17 = vector.shape_cast %14 : vector<32x32xf32> to vector<2x16x32xf32>
    %18 = arith.truncf %17 : vector<2x16x32xf32> to vector<2x16x32xbf16>
    %cst_14 = arith.constant dense<0.000000e+00> : vector<2x8x16xf32>
    %19 = tpu.matmul %16, %18, %cst_14 {dimension_numbers = #tpu.dot_dimension_numbers<[2], [2], [1], [1], [0, 0, 0, 1, 1, 1], [0], [0]>} : vector<2x8x32xbf16>, vector<2x16x32xbf16>, vector<2x8x16xf32> -> vector<2x8x16xf32>
    %c0_15 = arith.constant 0 : index
    %c0_16 = arith.constant 0 : index
    %c0_17 = arith.constant 0 : index
    %20 = vector.load %arg13[%c0_15, %c0_16, %c0_17] : memref<2x8x16xf32, #tpu.memory_space<vmem>>, vector<2x8x16xf32>
    tpu.vector_store %arg13[%c0_15, %c0_16, %c0_17], %19 {strides = array<i32>} : memref<2x8x16xf32, #tpu.memory_space<vmem>>, vector<2x8x16xf32>,
    %c0_18 = arith.constant 0 : index
    %c0_19 = arith.constant 0 : index
    %c0_20 = arith.constant 0 : index
    %21 = vector.load %arg4[%c0_18, %c0_19, %c0_20] : memref<2x8x1xi32, #tpu.memory_space<vmem>>, vector<2x8x1xi32>
    %cst_21 = arith.constant dense<0xFF800000> : vector<2x8xf32>
    %22 = vector.multi_reduction <maximumf>, %19, %cst_21 [2] : vector<2x8x16xf32> to vector<2x8xf32>
    %23 = vector.shape_cast %22 : vector<2x8xf32> to vector<2x8x1xf32>
    %24 = vector.broadcast %23 : vector<2x8x1xf32> to vector<2x8x16xf32>
    %25 = arith.subf %19, %24 : vector<2x8x16xf32>
    %26 = math.exp %25 : vector<2x8x16xf32>
    %cst_22 = arith.constant dense<0.000000e+00> : vector<2x8xf32>
    %27 = vector.multi_reduction <add>, %26, %cst_22 [2] : vector<2x8x16xf32> to vector<2x8xf32>
    %28 = vector.shape_cast %27 : vector<2x8xf32> to vector<2x8x1xf32>
    %29 = math.log %28 : vector<2x8x1xf32>
    %30 = arith.addf %29, %23 : vector<2x8x1xf32>
    %31 = tpu.iota {dimensions = array<i32: 2>} : vector<2x8x16xi32>
    %32 = vector.broadcast %21 : vector<2x8x1xi32> to vector<2x8x16xi32>
    %33 = arith.cmpi eq, %31, %32 : vector<2x8x16xi32>
    %cst_23 = arith.constant 0.000000e+00 : f32
    %34 = vector.broadcast %cst_23 : f32 to vector<2x8x16xf32>
    %35 = arith.select %33, %19, %34 : vector<2x8x16xi1>, vector<2x8x16xf32>
    %cst_24 = arith.constant dense<0.000000e+00> : vector<2x8xf32>
    %36 = vector.multi_reduction <add>, %35, %cst_24 [2] : vector<2x8x16xf32> to vector<2x8xf32>
    %37 = vector.shape_cast %36 : vector<2x8xf32> to vector<2x8x1xf32>
    %38 = arith.subf %30, %37 : vector<2x8x1xf32>
    %c0_25 = arith.constant 0 : index
    %c0_26 = arith.constant 0 : index
    %c0_27 = arith.constant 0 : index
    %39 = vector.load %arg14[%c0_25, %c0_26, %c0_27] : memref<2x8x1xf32, #tpu.memory_space<vmem>>, vector<2x8x1xf32>
    tpu.vector_store %arg14[%c0_25, %c0_26, %c0_27], %38 {strides = array<i32>} : memref<2x8x1xf32, #tpu.memory_space<vmem>>, vector<2x8x1xf32>,
    %c0_28 = arith.constant 0 : index
    %c0_29 = arith.constant 0 : index
    %c0_30 = arith.constant 0 : index
    %40 = vector.load %arg3[%c0_28, %c0_29, %c0_30] : memref<2x8x1xf32, #tpu.memory_space<vmem>>, vector<2x8x1xf32>
    %cst_31 = arith.constant dense<0.000000e+00> : vector<2x1xf32>
    %41 = vector.multi_reduction <add>, %40, %cst_31 [1] : vector<2x8x1xf32> to vector<2x1xf32>
    %42 = vector.shape_cast %41 : vector<2x1xf32> to vector<2x1x1xf32>
    %cst_32 = arith.constant 8.000000e+00 : f32
    %43 = vector.broadcast %cst_32 : f32 to vector<2x1x1xf32>
    %44 = arith.divf %42, %43 : vector<2x1x1xf32>
    %45 = vector.broadcast %44 : vector<2x1x1xf32> to vector<2x8x1xf32>
    %46 = arith.subf %40, %45 : vector<2x8x1xf32>
    %47 = arith.mulf %46, %46 : vector<2x8x1xf32>
    %cst_33 = arith.constant dense<0.000000e+00> : vector<2x1xf32>
    %48 = vector.multi_reduction <add>, %47, %cst_33 [1] : vector<2x8x1xf32> to vector<2x1xf32>
    %49 = vector.shape_cast %48 : vector<2x1xf32> to vector<2x1x1xf32>
    %cst_34 = arith.constant 8.000000e+00 : f32
    %50 = vector.broadcast %cst_34 : f32 to vector<2x1x1xf32>
    %51 = arith.divf %49, %50 : vector<2x1x1xf32>
    %52 = vector.broadcast %44 : vector<2x1x1xf32> to vector<2x8x1xf32>
    %53 = arith.subf %40, %52 : vector<2x8x1xf32>
    %cst_35 = arith.constant 9.99999997E-7 : f32
    %54 = vector.broadcast %cst_35 : f32 to vector<2x1x1xf32>
    %55 = arith.addf %51, %54 : vector<2x1x1xf32>
    %56 = math.rsqrt %55 : vector<2x1x1xf32>
    %57 = vector.broadcast %56 : vector<2x1x1xf32> to vector<2x8x1xf32>
    %58 = arith.mulf %53, %57 : vector<2x8x1xf32>
    %c0_36 = arith.constant 0 : index
    %c0_37 = arith.constant 0 : index
    %59 = vector.load %arg9[%c0_36, %c0_37] : memref<8x1xf32, #tpu.memory_space<vmem>>, vector<8x1xf32>
    %60 = vector.shape_cast %59 : vector<8x1xf32> to vector<1x8x1xf32>
    %61 = vector.broadcast %60 : vector<1x8x1xf32> to vector<2x8x1xf32>
    %62 = arith.mulf %58, %61 : vector<2x8x1xf32>
    %c0_38 = arith.constant 0 : index
    %c0_39 = arith.constant 0 : index
    %63 = vector.load %arg10[%c0_38, %c0_39] : memref<8x1xf32, #tpu.memory_space<vmem>>, vector<8x1xf32>
    %64 = vector.shape_cast %63 : vector<8x1xf32> to vector<1x8x1xf32>
    %65 = vector.broadcast %64 : vector<1x8x1xf32> to vector<2x8x1xf32>
    %66 = arith.addf %62, %65 : vector<2x8x1xf32>
    %67 = tpu.iota {dimensions = array<i32: 0>} : vector<2x8x1xi32>
    %c2_i32 = arith.constant 2 : i32
    %68 = arith.muli %arg0, %c2_i32 : i32
    %69 = vector.broadcast %68 : i32 to vector<2x8x1xi32>
    %70 = arith.addi %67, %69 : vector<2x8x1xi32>
    %c8_i32 = arith.constant 8 : i32
    %71 = vector.broadcast %c8_i32 : i32 to vector<2x8x1xi32>
    %72 = arith.muli %70, %71 : vector<2x8x1xi32>
    %73 = tpu.iota {dimensions = array<i32: 1>} : vector<2x8x1xi32>
    %74 = arith.addi %72, %73 : vector<2x8x1xi32>
    %c1_i32 = arith.constant 1 : i32
    %75 = vector.broadcast %c1_i32 : i32 to vector<2x8x1xi32>
    %76 = arith.addi %74, %75 : vector<2x8x1xi32>
    %c-1640531535_i32 = arith.constant -1640531535 : i32
    %77 = vector.broadcast %c-1640531535_i32 : i32 to vector<2x8x1xi32>
    %78 = arith.muli %76, %77 : vector<2x8x1xi32>
    %c0_40 = arith.constant 0 : index
    %79 = memref.load %arg11[%c0_40] : memref<1xi32, #tpu.memory_space<smem>>
    %80 = vector.broadcast %79 : i32 to vector<2x8x1xi32>
    %81 = arith.addi %78, %80 : vector<2x8x1xi32>
    %c16_i32 = arith.constant 16 : i32
    %82 = vector.broadcast %c16_i32 : i32 to vector<2x8x1xi32>
    %83 = arith.shrsi %81, %82 : vector<2x8x1xi32>
    %c65535_i32 = arith.constant 65535 : i32
    %84 = vector.broadcast %c65535_i32 : i32 to vector<2x8x1xi32>
    %85 = arith.andi %83, %84 : vector<2x8x1xi32>
    %86 = arith.xori %81, %85 : vector<2x8x1xi32>
    %c-2048144789_i32 = arith.constant -2048144789 : i32
    %87 = vector.broadcast %c-2048144789_i32 : i32 to vector<2x8x1xi32>
    %88 = arith.muli %86, %87 : vector<2x8x1xi32>
    %c13_i32 = arith.constant 13 : i32
    %89 = vector.broadcast %c13_i32 : i32 to vector<2x8x1xi32>
    %90 = arith.shrsi %88, %89 : vector<2x8x1xi32>
    %c524287_i32 = arith.constant 524287 : i32
    %91 = vector.broadcast %c524287_i32 : i32 to vector<2x8x1xi32>
    %92 = arith.andi %90, %91 : vector<2x8x1xi32>
    %93 = arith.xori %88, %92 : vector<2x8x1xi32>
    %c-1028477387_i32 = arith.constant -1028477387 : i32
    %94 = vector.broadcast %c-1028477387_i32 : i32 to vector<2x8x1xi32>
    %95 = arith.muli %93, %94 : vector<2x8x1xi32>
    %c16_i32_41 = arith.constant 16 : i32
    %96 = vector.broadcast %c16_i32_41 : i32 to vector<2x8x1xi32>
    %97 = arith.shrsi %95, %96 : vector<2x8x1xi32>
    %c65535_i32_42 = arith.constant 65535 : i32
    %98 = vector.broadcast %c65535_i32_42 : i32 to vector<2x8x1xi32>
    %99 = arith.andi %97, %98 : vector<2x8x1xi32>
    %100 = arith.xori %95, %99 : vector<2x8x1xi32>
    %c8388607_i32 = arith.constant 8388607 : i32
    %101 = vector.broadcast %c8388607_i32 : i32 to vector<2x8x1xi32>
    %102 = arith.andi %100, %101 : vector<2x8x1xi32>
    %103 = arith.sitofp %102 : vector<2x8x1xi32> to vector<2x8x1xf32>
    %cst_43 = arith.constant 1.1920929E-7 : f32
    %104 = vector.broadcast %cst_43 : f32 to vector<2x8x1xf32>
    %105 = arith.mulf %103, %104 : vector<2x8x1xf32>
    %cst_44 = arith.constant 2.000000e-01 : f32
    %106 = vector.broadcast %cst_44 : f32 to vector<2x8x1xf32>
    %107 = arith.cmpf oge, %105, %106 : vector<2x8x1xf32>
    %cst_45 = arith.constant 1.250000e+00 : f32
    %108 = vector.broadcast %cst_45 : f32 to vector<2x8x1xf32>
    %109 = arith.mulf %66, %108 : vector<2x8x1xf32>
    %cst_46 = arith.constant 0.000000e+00 : f32
    %110 = vector.broadcast %cst_46 : f32 to vector<2x8x1xf32>
    %111 = arith.select %107, %109, %110 : vector<2x8x1xi1>, vector<2x8x1xf32>
    %112 = vector.broadcast %111 : vector<2x8x1xf32> to vector<2x8x32xf32>
    %113 = arith.addf %112, %1 : vector<2x8x32xf32>
    %c0_47 = arith.constant 0 : index
    %c0_48 = arith.constant 0 : index
    %c0_49 = arith.constant 0 : index
    %114 = vector.load %arg12[%c0_47, %c0_48, %c0_49] : memref<2x8x32xf32, #tpu.memory_space<vmem>>, vector<2x8x32xf32>
    tpu.vector_store %arg12[%c0_47, %c0_48, %c0_49], %113 {strides = array<i32>} : memref<2x8x32xf32, #tpu.memory_space<vmem>>, vector<2x8x32xf32>,
    return
  }
  func.func @transform_0(%arg0: i32) -> (i32, i32, i32) {
    %c0_i32 = arith.constant 0 : i32
    %c0_i32_0 = arith.constant 0 : i32
    %c0_i32_1 = arith.constant 0 : i32
    return %arg0, %c0_i32, %c0_i32_0 : i32, i32, i32
  }
  func.func @transform_1(%arg0: i32) -> (i32, i32, i32) {
    %c0_i32 = arith.constant 0 : i32
    %c0_i32_0 = arith.constant 0 : i32
    %c0_i32_1 = arith.constant 0 : i32
    return %arg0, %c0_i32, %c0_i32_0 : i32, i32, i32
  }
  func.func @transform_2(%arg0: i32) -> (i32, i32, i32) {
    %c0_i32 = arith.constant 0 : i32
    %c0_i32_0 = arith.constant 0 : i32
    %c0_i32_1 = arith.constant 0 : i32
    return %arg0, %c0_i32, %c0_i32_0 : i32, i32, i32
  }
  func.func @transform_3(%arg0: i32) -> (i32, i32, i32) {
    %c0_i32 = arith.constant 0 : i32
    %c0_i32_0 = arith.constant 0 : i32
    %c0_i32_1 = arith.constant 0 : i32
    return %arg0, %c0_i32, %c0_i32_0 : i32, i32, i32
  }
  func.func @transform_4(%arg0: i32) -> (i32, i32) {
    %c0_i32 = arith.constant 0 : i32
    %c0_i32_0 = arith.constant 0 : i32
    %c0_i32_1 = arith.constant 0 : i32
    return %c0_i32, %c0_i32_0 : i32, i32
  }
  func.func @transform_5(%arg0: i32) -> (i32, i32) {
    %c0_i32 = arith.constant 0 : i32
    %c0_i32_0 = arith.constant 0 : i32
    %c0_i32_1 = arith.constant 0 : i32
    return %c0_i32, %c0_i32_0 : i32, i32
  }
  func.func @transform_6(%arg0: i32) -> (i32, i32) {
    %c0_i32 = arith.constant 0 : i32
    %c0_i32_0 = arith.constant 0 : i32
    %c0_i32_1 = arith.constant 0 : i32
    return %c0_i32, %c0_i32_0 : i32, i32
  }
  func.func @transform_7(%arg0: i32) -> (i32, i32) {
    %c0_i32 = arith.constant 0 : i32
    %c0_i32_0 = arith.constant 0 : i32
    %c0_i32_1 = arith.constant 0 : i32
    return %c0_i32, %c0_i32_0 : i32, i32
  }
  func.func @transform_8(%arg0: i32) -> (i32, i32) {
    %c0_i32 = arith.constant 0 : i32
    %c0_i32_0 = arith.constant 0 : i32
    %c0_i32_1 = arith.constant 0 : i32
    return %c0_i32, %c0_i32_0 : i32, i32
  }
  func.func @transform_9(%arg0: i32) -> (i32, i32) {
    %c0_i32 = arith.constant 0 : i32
    %c0_i32_0 = arith.constant 0 : i32
    %c0_i32_1 = arith.constant 0 : i32
    return %c0_i32, %c0_i32_0 : i32, i32
  }
  func.func @transform_10(%arg0: i32) -> i32 {
    %c0_i32 = arith.constant 0 : i32
    %c0_i32_0 = arith.constant 0 : i32
    return %c0_i32 : i32
  }
  func.func @transform_11(%arg0: i32) -> (i32, i32, i32) {
    %c0_i32 = arith.constant 0 : i32
    %c0_i32_0 = arith.constant 0 : i32
    %c0_i32_1 = arith.constant 0 : i32
    return %arg0, %c0_i32, %c0_i32_0 : i32, i32, i32
  }
  func.func @transform_12(%arg0: i32) -> (i32, i32, i32) {
    %c0_i32 = arith.constant 0 : i32
    %c0_i32_0 = arith.constant 0 : i32
    %c0_i32_1 = arith.constant 0 : i32
    return %arg0, %c0_i32, %c0_i32_0 : i32, i32, i32
  }
  func.func @transform_13(%arg0: i32) -> (i32, i32, i32) {
    %c0_i32 = arith.constant 0 : i32
    %c0_i32_0 = arith.constant 0 : i32
    %c0_i32_1 = arith.constant 0 : i32
    return %arg0, %c0_i32, %c0_i32_0 : i32, i32, i32
  }
}

</mosaic_0001>

<llo_original>
// kernel: tpu_custom_call.1
$region0: #{tpu_custom_call.1}
  #allocation0 [shape = 'u32[]', space=smem, size = 0x4, offset = 0x4, fixed_abs, tag = 'smem constant byte address 0x4 - core index']
  #allocation1 [shape = 'u32[144,128]{1,0:T(1,128)}', space=vmem, size = 0x12000, scoped, tag = 'internal scratch']
  #allocation2 [shape = 's32[1]{0:T(128)S(6)}', space=smem, size = 0x200, scoped, tag = 'scoped memory for tpu_custom_call.1']
  %s0 = inlined_call_operand.vmem [shape: bf16[2,16,32], index: 0, kind: input, shape index: {}]
  %s1 = inlined_call_operand.vmem [shape: f32[2,8,32], index: 1, kind: input, shape index: {}]
  %s2 = inlined_call_operand.vmem [shape: f32[2,8,1], index: 2, kind: input, shape index: {}]
  %s3 = inlined_call_operand.vmem [shape: s32[2,8,1], index: 3, kind: input, shape index: {}]
  %s4 = inlined_call_operand.vmem [shape: bf16[32,32], index: 4, kind: input, shape index: {}]
  %s5 = inlined_call_operand.vmem [shape: f32[1,32], index: 5, kind: input, shape index: {}]
  %s6 = inlined_call_operand.vmem [shape: bf16[32,32], index: 6, kind: input, shape index: {}]
  %s7 = inlined_call_operand.vmem [shape: f32[1,32], index: 7, kind: input, shape index: {}]
  %s8 = inlined_call_operand.vmem [shape: f32[8,1], index: 8, kind: input, shape index: {}]
  %s9 = inlined_call_operand.vmem [shape: f32[8,1], index: 9, kind: input, shape index: {}]
  %s10 = inlined_call_operand.<no memory space> [shape: s32[1], index: 10, kind: input, shape index: {}]
  %s11 = inlined_call_operand.hbm [shape: f32[2,8,32], index: 11, kind: output, shape index: {0}]
  %s12 = inlined_call_operand.hbm [shape: f32[2,8,16], index: 12, kind: output, shape index: {1}]
  %s13 = inlined_call_operand.vmem [shape: f32[2,8,1], index: 13, kind: output, shape index: {2}]
  %14 = xla_tuple %s11, %s12, %s13
  %s15 = sld [smem:[#allocation0]]
  $region70: #{tpu_custom_call.1} parent=0
    _
  %s17 = ssub.s32 1, %s15
  %s18 = scalar_select 0, %s17, %s15
  %19 = sst [smem:[#allocation2]] %s10
  $region1: #{tpu_custom_call.1} parent=0
    #allocation3 [shape = 'u8[8192]{0}', space=vmem, size = 0x2000, scoped, tag = 'output window, operand 0, single buffered']
    #allocation4 [shape = 's32[1]{0}', space=sflag, size = 0x4, scoped, tag = 'scoped memory for tpu_custom_call.1']
    #allocation5 [shape = 'u8[8192]{0}', space=vmem, size = 0x2000, scoped, tag = 'output window, operand 1, single buffered']
    #allocation6 [shape = 's32[1]{0}', space=sflag, size = 0x4, scoped, tag = 'scoped memory for tpu_custom_call.1']
    %20 = vsyncpa [#allocation4], 0
    %21 = vsyncpa [#allocation6], 0
    // Predicated region
    $region2: #{tpu_custom_call.1} parent=1 // pred_check
      _
    $region3: #{tpu_custom_call.1} parent=1 // pred_check_branch
      %23 = sbr.rel (0) target = $region5
    $region4: #{tpu_custom_call.1} parent=1 // pred_region
      _
    $region5: #{tpu_custom_call.1} parent=1 // pred_fallthru
      _
    // Predicated region
    $region6: #{tpu_custom_call.1} parent=1 // pred_check
      _
    $region7: #{tpu_custom_call.1} parent=1 // pred_check_branch
      %25 = sbr.rel (0) target = $region9
    $region8: #{tpu_custom_call.1} parent=1 // pred_region
      _
    $region9: #{tpu_custom_call.1} parent=1 // pred_fallthru
      _
    // Predicated region
    $region10: #{tpu_custom_call.1} parent=1 // pred_check
      _
    $region11: #{tpu_custom_call.1} parent=1 // pred_check_branch
      %27 = sbr.rel (0) target = $region13
    $region12: #{tpu_custom_call.1} parent=1 // pred_region
      _
    $region13: #{tpu_custom_call.1} parent=1 // pred_fallthru
      _
    // Predicated region
    $region14: #{tpu_custom_call.1} parent=1 // pred_check
      _
    $region15: #{tpu_custom_call.1} parent=1 // pred_check_branch
      %29 = sbr.rel (0) target = $region17
    $region16: #{tpu_custom_call.1} parent=1 // pred_region
      _
    $region17: #{tpu_custom_call.1} parent=1 // pred_fallthru
      _
    // Predicated region
    $region18: #{tpu_custom_call.1} parent=1 // pred_check
      _
    $region19: #{tpu_custom_call.1} parent=1 // pred_check_branch
      %31 = sbr.rel (0) target = $region21
    $region20: #{tpu_custom_call.1} parent=1 // pred_region
      _
    $region21: #{tpu_custom_call.1} parent=1 // pred_fallthru
      _
    // Predicated region
    $region22: #{tpu_custom_call.1} parent=1 // pred_check
      _
    $region23: #{tpu_custom_call.1} parent=1 // pred_check_branch
      %33 = sbr.rel (0) target = $region25
    $region24: #{tpu_custom_call.1} parent=1 // pred_region
      _
    $region25: #{tpu_custom_call.1} parent=1 // pred_fallthru
      _
    // Predicated region
    $region26: #{tpu_custom_call.1} parent=1 // pred_check
      _
    $region27: #{tpu_custom_call.1} parent=1 // pred_check_branch
      %35 = sbr.rel (0) target = $region29
    $region28: #{tpu_custom_call.1} parent=1 // pred_region
      _
    $region29: #{tpu_custom_call.1} parent=1 // pred_fallthru
      _
    // Predicated region
    $region30: #{tpu_custom_call.1} parent=1 // pred_check
      _
    $region31: #{tpu_custom_call.1} parent=1 // pred_check_branch
      %37 = sbr.rel (0) target = $region33
    $region32: #{tpu_custom_call.1} parent=1 // pred_region
      _
    $region33: #{tpu_custom_call.1} parent=1 // pred_fallthru
      _
    // Predicated region
    $region34: #{tpu_custom_call.1} parent=1 // pred_check
      _
    $region35: #{tpu_custom_call.1} parent=1 // pred_check_branch
      %39 = sbr.rel (0) target = $region37
    $region36: #{tpu_custom_call.1} parent=1 // pred_region
      _
    $region37: #{tpu_custom_call.1} parent=1 // pred_fallthru
      _
    // Predicated region
    $region38: #{tpu_custom_call.1} parent=1 // pred_check
      _
    $region39: #{tpu_custom_call.1} parent=1 // pred_check_branch
      %41 = sbr.rel (0) target = $region41
    $region40: #{tpu_custom_call.1} parent=1 // pred_region
      _
    $region41: #{tpu_custom_call.1} parent=1 // pred_fallthru
      _
    // Predicated region
    $region42: #{tpu_custom_call.1} parent=1 // pred_check
      _
    $region43: #{tpu_custom_call.1} parent=1 // pred_check_branch
      %43 = sbr.rel (0) target = $region45
    $region44: #{tpu_custom_call.1} parent=1 // pred_region
      _
    $region45: #{tpu_custom_call.1} parent=1 // pred_fallthru
      _
    %v45 = vld [vmem:[%s0] sm:$0xf]
    %v46 = vld [vmem:[%s0 + $0x4] sm:$0xf]
    %v47 = vld [vmem:[%s0 + $0x8] sm:$0xf]
    %v48 = vld [vmem:[%s0 + $0xc] sm:$0xf]
    %v49 = vld [vmem:[%s1] sm:$0xff]
    %v50 = vld [vmem:[%s1 + $0x8] sm:$0xff]
    %v51 = vpack.c.bf16 %v49, %v49
    %v52 = vpack.c.bf16 %v50, %v50
    %v53 = vld [vmem:[%s4] sm:$0xf]
    %v54 = vld [vmem:[%s4 + $0x4] sm:$0xf]
    %v55 = vld [vmem:[%s4 + $0x8] sm:$0xf]
    %v56 = vld [vmem:[%s4 + $0xc] sm:$0xf]
    %v57 = vld [vmem:[%s5] sm:$0x1]
    %v59 = vlaneseq
    %v60 = vshrl.u32 %v59, 7
    %v61 = vsub.s32 0, %v60
    %v62 = vrot.slane %v57, %v61
    %v66 = vunpack.c.l.b16 %v51
    %v67 = vunpack.c.l.b16 %v52
    %v68 = vpack.c.b16 %v67, %v66
    %v73 = vunpack.c.l.b16 %v53
    %v74 = vunpack.c.l.b16 %v54
    %v75 = vunpack.c.l.b16 %v55
    %v76 = vunpack.c.l.b16 %v56
    %v77 = vpack.c.b16 %v74, %v73
    %v78 = vpack.c.b16 %v76, %v75
    %vm79 = vcmask 261120
    %v81 = vsel %vm79, %v68, 0
    %v84 = vsel %vm79, %v77, 0
    %v87 = vsel %vm79, %v78, 0
    %89 = vmatprep.subr.bf16.mxu0 0
    %90 = vmatpush1.bf16.xpose.msra.mxu0 %v84
    %91 = vmatprep.subr.bf16.mxu0 0
    %92 = vmatpush1.bf16.xpose.msra.mxu0 %v87
    %93 = vmatprep.subr.bf16.mxu0 0
    %94 = vmatpush1.bf16.xpose.msra.mxu0 0
    %95 = vmatprep.subr.bf16.mxu0 0
    %96 = vmatpush1.bf16.xpose.msra.mxu0 0
    %97 = vmatprep.subr.bf16.mxu0 0
    %98 = vmatpush1.bf16.xpose.msra.mxu0 0
    %99 = vmatprep.subr.bf16.mxu0 0
    %100 = vmatpush1.bf16.xpose.msra.mxu0 0
    %101 = vmatprep.subr.bf16.mxu0 0
    %102 = vmatpush1.bf16.xpose.msra.mxu0 0
    %103 = vmatprep.subr.bf16.mxu0 0
    %104 = vmatpush1.bf16.xpose.msra.mxu0 0
    %105 = vmatprep.subr.bf16.mxu0 0
    %106 = vmatpush1.bf16.xpose.msra.mxu0 0
    %107 = vmatprep.subr.bf16.mxu0 0
    %108 = vmatpush1.bf16.xpose.msra.mxu0 0
    %109 = vmatprep.subr.bf16.mxu0 0
    %110 = vmatpush1.bf16.xpose.msra.mxu0 0
    %111 = vmatprep.subr.bf16.mxu0 0
    %112 = vmatpush1.bf16.xpose.msra.mxu0 0
    %113 = vmatprep.subr.bf16.mxu0 0
    %114 = vmatpush1.bf16.xpose.msra.mxu0 0
    %115 = vmatprep.subr.bf16.mxu0 0
    %116 = vmatpush1.bf16.xpose.msra.mxu0 0
    %117 = vmatprep.subr.bf16.mxu0 0
    %118 = vmatpush1.bf16.xpose.msra.mxu0 0
    %119 = vmatprep.subr.bf16.mxu0 0
    %120 = vmatpush1.bf16.xpose.msra.mxu0 0
    %121 = vmatprep.mubr.bf16.mxu0 0
    %122 = vmatmul.mubr.bf16.gmra.mrb[0].mxu0 %v81
    %v123 = vpop.f32.mrb[0].mxu0
    %v124 = vadd.f32 %v62, %v123
    %v125 = vpop.f32.mrb[0].mxu0
    %v126 = vpop.f32.mrb[0].mxu0
    %v127 = vadd.f32 %v62, %v126
    %v128 = vpop.f32.mrb[0].mxu0
    %129 = vdwg.mxu0
    %v130 = vld [vmem:[%s6] sm:$0xf]
    %v131 = vld [vmem:[%s6 + $0x4] sm:$0xf]
    %v132 = vld [vmem:[%s6 + $0x8] sm:$0xf]
    %v133 = vld [vmem:[%s6 + $0xc] sm:$0xf]
    %v134 = vld [vmem:[%s7] sm:$0x1]
    %v136 = vlaneseq
    %v137 = vshrl.u32 %v136, 7
    %v138 = vsub.s32 0, %v137
    %v139 = vrot.slane %v134, %v138
    %v145 = vunpack.c.l.b16 %v45
    %v146 = vunpack.c.l.b16 %v46
    %v147 = vunpack.c.l.b16 %v47
    %v148 = vunpack.c.l.b16 %v48
    %v149 = vpack.c.b16 %v146, %v145
    %v150 = vpack.c.b16 %v148, %v147
    %v155 = vunpack.c.l.b16 %v130
    %v156 = vunpack.c.l.b16 %v131
    %v157 = vunpack.c.l.b16 %v132
    %v158 = vunpack.c.l.b16 %v133
    %v159 = vpack.c.b16 %v156, %v155
    %v160 = vpack.c.b16 %v158, %v157
    %v162 = vsel %vm79, %v149, 0
    %v165 = vsel %vm79, %v150, 0
    %v168 = vsel %vm79, %v159, 0
    %v171 = vsel %vm79, %v160, 0
    %173 = vmatprep.subr.bf16.mxu0 0
    %174 = vmatpush1.bf16.xpose.msra.mxu0 %v168
    %175 = vmatprep.subr.bf16.mxu0 0
    %176 = vmatpush1.bf16.xpose.msra.mxu0 %v171
    %177 = vmatprep.subr.bf16.mxu0 0
    %178 = vmatpush1.bf16.xpose.msra.mxu0 0
    %179 = vmatprep.subr.bf16.mxu0 0
    %180 = vmatpush1.bf16.xpose.msra.mxu0 0
    %181 = vmatprep.subr.bf16.mxu0 0
    %182 = vmatpush1.bf16.xpose.msra.mxu0 0
    %183 = vmatprep.subr.bf16.mxu0 0
    %184 = vmatpush1.bf16.xpose.msra.mxu0 0
    %185 = vmatprep.subr.bf16.mxu0 0
    %186 = vmatpush1.bf16.xpose.msra.mxu0 0
    %187 = vmatprep.subr.bf16.mxu0 0
    %188 = vmatpush1.bf16.xpose.msra.mxu0 0
    %189 = vmatprep.subr.bf16.mxu0 0
    %190 = vmatpush1.bf16.xpose.msra.mxu0 0
    %191 = vmatprep.subr.bf16.mxu0 0
    %192 = vmatpush1.bf16.xpose.msra.mxu0 0
    %193 = vmatprep.subr.bf16.mxu0 0
    %194 = vmatpush1.bf16.xpose.msra.mxu0 0
    %195 = vmatprep.subr.bf16.mxu0 0
    %196 = vmatpush1.bf16.xpose.msra.mxu0 0
    %197 = vmatprep.subr.bf16.mxu0 0
    %198 = vmatpush1.bf16.xpose.msra.mxu0 0
    %199 = vmatprep.subr.bf16.mxu0 0
    %200 = vmatpush1.bf16.xpose.msra.mxu0 0
    %201 = vmatprep.subr.bf16.mxu0 0
    %202 = vmatpush1.bf16.xpose.msra.mxu0 0
    %203 = vmatprep.subr.bf16.mxu0 0
    %204 = vmatpush1.bf16.xpose.msra.mxu0 0
    %205 = vmatprep.mubr.bf16.mxu0 0
    %206 = vmatmul.mubr.bf16.gmra.mrb[0].mxu0 %v162
    %v207 = vpop.f32.mrb[0].mxu0
    %v208 = vadd.f32 %v139, %v207
    %v209 = vpop.f32.mrb[0].mxu0
    %v210 = vpop.f32.mrb[0].mxu0
    %v211 = vadd.f32 %v139, %v210
    %v212 = vpop.f32.mrb[0].mxu0
    %213 = vmatprep.mubr.bf16.mxu0 0
    %214 = vmatmul.mubr.bf16.gmra.mrb[0].mxu0 %v165
    %v215 = vpop.f32.mrb[0].mxu0
    %v216 = vadd.f32 %v139, %v215
    %v217 = vpop.f32.mrb[0].mxu0
    %v218 = vpop.f32.mrb[0].mxu0
    %v219 = vadd.f32 %v139, %v218
    %v220 = vpop.f32.mrb[0].mxu0
    %221 = vdwg.mxu0
    %v222 = vpack.c.bf16 %v124, %v124
    %v223 = vpack.c.bf16 %v127, %v127
    %v224 = vpack.c.bf16 %v211, %v208
    %v225 = vpack.c.bf16 %v219, %v216
    %v227 = vsel %vm79, %v222, 0
    %v230 = vsel %vm79, %v224, 0
    %232 = vmatprep.subr.bf16.mxu0 0
    %233 = vmatpush1.bf16.xpose.msra.mxu0 %v230
    %234 = vmatprep.subr.bf16.mxu0 0
    %235 = vmatpush1.bf16.xpose.msra.mxu0 0
    %236 = vmatprep.subr.bf16.mxu0 0
    %237 = vmatpush1.bf16.xpose.msra.mxu0 0
    %238 = vmatprep.subr.bf16.mxu0 0
    %239 = vmatpush1.bf16.xpose.msra.mxu0 0
    %240 = vmatprep.subr.bf16.mxu0 0
    %241 = vmatpush1.bf16.xpose.msra.mxu0 0
    %242 = vmatprep.subr.bf16.mxu0 0
    %243 = vmatpush1.bf16.xpose.msra.mxu0 0
    %244 = vmatprep.subr.bf16.mxu0 0
    %245 = vmatpush1.bf16.xpose.msra.mxu0 0
    %246 = vmatprep.subr.bf16.mxu0 0
    %247 = vmatpush1.bf16.xpose.msra.mxu0 0
    %248 = vmatprep.subr.bf16.mxu0 0
    %249 = vmatpush1.bf16.xpose.msra.mxu0 0
    %250 = vmatprep.subr.bf16.mxu0 0
    %251 = vmatpush1.bf16.xpose.msra.mxu0 0
    %252 = vmatprep.subr.bf16.mxu0 0
    %253 = vmatpush1.bf16.xpose.msra.mxu0 0
    %254 = vmatprep.subr.bf16.mxu0 0
    %255 = vmatpush1.bf16.xpose.msra.mxu0 0
    %256 = vmatprep.subr.bf16.mxu0 0
    %257 = vmatpush1.bf16.xpose.msra.mxu0 0
    %258 = vmatprep.subr.bf16.mxu0 0
    %259 = vmatpush1.bf16.xpose.msra.mxu0 0
    %260 = vmatprep.subr.bf16.mxu0 0
    %261 = vmatpush1.bf16.xpose.msra.mxu0 0
    %262 = vmatprep.subr.bf16.mxu0 0
    %263 = vmatpush1.bf16.xpose.msra.mxu0 0
    %264 = vmatprep.mubr.bf16.mxu0 0
    %265 = vmatmul.mubr.bf16.gmra.mrb[0].mxu0 %v227
    %v266 = vpop.f32.mrb[0].mxu0
    %v267 = vadd.f32 0.0, %v266
    %v268 = vpop.f32.mrb[0].mxu0
    %v269 = vpop.f32.mrb[0].mxu0
    %v270 = vpop.f32.mrb[0].mxu0
    %271 = vdwg.mxu0
    %v273 = vsel %vm79, %v223, 0
    %v276 = vsel %vm79, %v225, 0
    %278 = vmatprep.subr.bf16.mxu0 0
    %279 = vmatpush1.bf16.xpose.msra.mxu0 %v276
    %280 = vmatprep.subr.bf16.mxu0 0
    %281 = vmatpush1.bf16.xpose.msra.mxu0 0
    %282 = vmatprep.subr.bf16.mxu0 0
    %283 = vmatpush1.bf16.xpose.msra.mxu0 0
    %284 = vmatprep.subr.bf16.mxu0 0
    %285 = vmatpush1.bf16.xpose.msra.mxu0 0
    %286 = vmatprep.subr.bf16.mxu0 0
    %287 = vmatpush1.bf16.xpose.msra.mxu0 0
    %288 = vmatprep.subr.bf16.mxu0 0
    %289 = vmatpush1.bf16.xpose.msra.mxu0 0
    %290 = vmatprep.subr.bf16.mxu0 0
    %291 = vmatpush1.bf16.xpose.msra.mxu0 0
    %292 = vmatprep.subr.bf16.mxu0 0
    %293 = vmatpush1.bf16.xpose.msra.mxu0 0
    %294 = vmatprep.subr.bf16.mxu0 0
    %295 = vmatpush1.bf16.xpose.msra.mxu0 0
    %296 = vmatprep.subr.bf16.mxu0 0
    %297 = vmatpush1.bf16.xpose.msra.mxu0 0
    %298 = vmatprep.subr.bf16.mxu0 0
    %299 = vmatpush1.bf16.xpose.msra.mxu0 0
    %300 = vmatprep.subr.bf16.mxu0 0
    %301 = vmatpush1.bf16.xpose.msra.mxu0 0
    %302 = vmatprep.subr.bf16.mxu0 0
    %303 = vmatpush1.bf16.xpose.msra.mxu0 0
    %304 = vmatprep.subr.bf16.mxu0 0
    %305 = vmatpush1.bf16.xpose.msra.mxu0 0
    %306 = vmatprep.subr.bf16.mxu0 0
    %307 = vmatpush1.bf16.xpose.msra.mxu0 0
    %308 = vmatprep.subr.bf16.mxu0 0
    %309 = vmatpush1.bf16.xpose.msra.mxu0 0
    %310 = vmatprep.mubr.bf16.mxu0 0
    %311 = vmatmul.mubr.bf16.gmra.mrb[0].mxu0 %v273
    %v312 = vpop.f32.mrb[0].mxu0
    %v313 = vadd.f32 0.0, %v312
    %v314 = vpop.f32.mrb[0].mxu0
    %v315 = vpop.f32.mrb[0].mxu0
    %v316 = vpop.f32.mrb[0].mxu0
    %317 = vdwg.mxu0
    %vm318 = vcmask 130048
    %319 = vst.msk [vmem:[#allocation5] sm:$0xff] %vm318, %v267
    %320 = vst.msk [vmem:[#allocation5 + $0x8] sm:$0xff] %vm318, %v313
    %v321 = vld [vmem:[%s3] sm:$0xff]
    %v322 = vld [vmem:[%s3 + $0x8] sm:$0xff]
    %v323 = vsel %vm318, %v267, -inf
    %324 = vmax.xlane.f32.xlu0 %v323
    %v325 = vpop.xlane.xlu0 %324
    %v326 = vsel %vm318, %v313, -inf
    %327 = vmax.xlane.f32.xlu0 %v326
    %v328 = vpop.xlane.xlu0 %327
    %v329 = vsub.f32 %v267, %v325
    %v330 = vsub.f32 %v313, %v328
    %v331 = vmul.f32 %v329, 1.442695
    %v332 = vpow.pop %v331
    %v333 = vmul.f32 %v330, 1.442695
    %v334 = vpow.pop %v333
    %v335 = vsel %vm318, %v332, 0.0
    %336 = vadd.xlane.f32.xlu0 %v335
    %v337 = vpop.xlane.xlu0 %336
    %v338 = vsel %vm318, %v334, 0.0
    %339 = vadd.xlane.f32.xlu0 %v338
    %v340 = vpop.xlane.xlu0 %339
    %v341 = vlog2.pop %v337
    %v342 = vmul.f32 %v341, 0.6931472
    %v343 = vlog2.pop %v340
    %v344 = vmul.f32 %v343, 0.6931472
    %v345 = vadd.f32 %v342, %v325
    %v346 = vadd.f32 %v344, %v328
    %v347 = vlaneseq
    %v348 = vand.u32 %v347, 127
    %349 = vset.pattern.permute.xlu0 0
    %350 = vperm.xlu0 %349, %v321
    %v351 = vpop.permute.xlu0 %350
    %352 = vset.pattern.permute.xlu0 0
    %353 = vperm.xlu0 %352, %v322
    %v354 = vpop.permute.xlu0 %353
    %vm355 = vcmp.eq.s32.totalorder %v348, %v351
    %vm356 = vcmp.eq.s32.totalorder %v348, %v354
    %v357 = vsel %vm355, %v267, 0.0
    %v358 = vsel %vm356, %v313, 0.0
    %v359 = vsel %vm318, %v357, 0.0
    %360 = vadd.xlane.f32.xlu0 %v359
    %v361 = vpop.xlane.xlu0 %360
    %v362 = vsel %vm318, %v358, 0.0
    %363 = vadd.xlane.f32.xlu0 %v362
    %v364 = vpop.xlane.xlu0 %363
    %v365 = vsub.f32 %v345, %v361
    %v366 = vsub.f32 %v346, %v364
    %vm367 = vcmask 7168
    %368 = vst.msk [vmem:[%s13] sm:$0xff] %vm367, %v365
    %369 = vst.msk [vmem:[%s13 + $0x8] sm:$0xff] %vm367, %v366
    %v370 = vld [vmem:[%s2] sm:$0xff]
    %v371 = vld [vmem:[%s2 + $0x8] sm:$0xff]
    %v372 = vsel %vm367, %v370, 0.0
    %v373 = vrot.slane %v372, 4
    %v374 = vadd.f32 %v372, %v373
    %v375 = vrot.slane %v374, 2
    %v376 = vadd.f32 %v374, %v375
    %v377 = vrot.slane %v376, 1
    %v378 = vadd.f32 %v376, %v377
    %v379 = vsel %vm367, %v371, 0.0
    %v380 = vrot.slane %v379, 4
    %v381 = vadd.f32 %v379, %v380
    %v382 = vrot.slane %v381, 2
    %v383 = vadd.f32 %v381, %v382
    %v384 = vrot.slane %v383, 1
    %v385 = vadd.f32 %v383, %v384
    %v386 = vrcp.pop 8.0
    %v387 = vmul.f32 %v378, %v386
    %v388 = vmul.f32 %v385, %v386
    %v389 = vsub.f32 %v370, %v387
    %v390 = vsub.f32 %v371, %v388
    %v391 = vmul.f32 %v389, %v389
    %v392 = vmul.f32 %v390, %v390
    %v393 = vsel %vm367, %v391, 0.0
    %v394 = vrot.slane %v393, 4
    %v395 = vadd.f32 %v393, %v394
    %v396 = vrot.slane %v395, 2
    %v397 = vadd.f32 %v395, %v396
    %v398 = vrot.slane %v397, 1
    %v399 = vadd.f32 %v397, %v398
    %v400 = vsel %vm367, %v392, 0.0
    %v401 = vrot.slane %v400, 4
    %v402 = vadd.f32 %v400, %v401
    %v403 = vrot.slane %v402, 2
    %v404 = vadd.f32 %v402, %v403
    %v405 = vrot.slane %v404, 1
    %v406 = vadd.f32 %v404, %v405
    %v407 = vmul.f32 %v399, %v386
    %v408 = vmul.f32 %v406, %v386
    %v409 = vadd.f32 %v407, 1e-06
    %v410 = vadd.f32 %v408, 1e-06
    %v411 = vrsqrt.pop %v409
    %v412 = vrsqrt.pop %v410
    %v413 = vmul.f32 %v389, %v411
    %v414 = vmul.f32 %v390, %v412
    %v415 = vld [vmem:[%s8] sm:$0xff]
    %v416 = vmul.f32 %v413, %v415
    %v417 = vmul.f32 %v414, %v415
    %v418 = vld [vmem:[%s9] sm:$0xff]
    %v419 = vadd.f32 %v416, %v418
    %v420 = vadd.f32 %v417, %v418
    %s421 = smul.u32 0, 2
    %v422 = vstv %s421
    %v423 = vadd.s32 %v422, 1
    %v424 = vmul.u32 %v422, 8
    %v425 = vmul.u32 %v423, 8
    %v426 = vlaneseq
    %v427 = vshrl.u32 %v426, 7
    %v428 = vadd.s32 %v424, %v427
    %v429 = vadd.s32 %v425, %v427
    %v430 = vadd.s32 %v428, 1
    %v431 = vadd.s32 %v429, 1
    %v432 = vmul.u32 %v430, 2654435761
    %v433 = vmul.u32 %v431, 2654435761
    %s434 = sld [smem:[#allocation2]]
    %v435 = vstv %s434
    %v436 = vadd.s32 %v432, %v435
    %v437 = vadd.s32 %v433, %v435
    %v438 = vshra.s32 %v436, 16
    %v439 = vshra.s32 %v437, 16
    %v440 = vand.u32 %v438, 65535
    %v441 = vand.u32 %v439, 65535
    %v442 = vxor.u32 %v436, %v440
    %v443 = vxor.u32 %v437, %v441
    %v444 = vmul.u32 %v442, 2246822507
    %v445 = vmul.u32 %v443, 2246822507
    %v446 = vshra.s32 %v444, 13
    %v447 = vshra.s32 %v445, 13
    %v448 = vand.u32 %v446, 524287
    %v449 = vand.u32 %v447, 524287
    %v450 = vxor.u32 %v444, %v448
    %v451 = vxor.u32 %v445, %v449
    %v452 = vmul.u32 %v450, 3266489909
    %v453 = vmul.u32 %v451, 3266489909
    %v454 = vshra.s32 %v452, 16
    %v455 = vshra.s32 %v453, 16
    %v456 = vand.u32 %v454, 65535
    %v457 = vand.u32 %v455, 65535
    %v458 = vxor.u32 %v452, %v456
    %v459 = vxor.u32 %v453, %v457
    %v460 = vand.u32 %v458, 8388607
    %v461 = vand.u32 %v459, 8388607
    %v462 = vcvt.s32.f32 %v460
    %v463 = vcvt.s32.f32 %v461
    %v464 = vmul.f32 %v462, 1.1920929e-07
    %v465 = vmul.f32 %v463, 1.1920929e-07
    %vm466 = vcmp.ge.f32.partialorder %v464, 0.2
    %vm467 = vcmp.ge.f32.partialorder %v465, 0.2
    %v468 = vmul.f32 %v419, 1.25
    %v469 = vmul.f32 %v420, 1.25
    %v470 = vsel %vm466, %v468, 0.0
    %v471 = vsel %vm467, %v469, 0.0
    %473 = vset.pattern.permute.xlu0 0
    %474 = vperm.xlu0 %473, %v470
    %v475 = vpop.permute.xlu0 %474
    %478 = vset.pattern.permute.xlu0 0
    %479 = vperm.xlu0 %478, %v471
    %v480 = vpop.permute.xlu0 %479
    %v482 = vadd.f32 %v475, %v49
    %v483 = vadd.f32 %v480, %v50
    %484 = vst.msk [vmem:[#allocation3] sm:$0xff] %vm79, %v482
    %485 = vst.msk [vmem:[#allocation3 + $0x8] sm:$0xff] %vm79, %v483
    // Predicated region
    $region46: #{tpu_custom_call.1} parent=1 // pred_check
      _
    $region47: #{tpu_custom_call.1} parent=1 // pred_check_branch
      %487 = sbr.rel (0) target = $region49
    $region48: #{tpu_custom_call.1} parent=1 // pred_region
      %s489 = ssub.s32 256, 256
      %490 = vsyncadd [#allocation4], %s489
      %s491 = sshll.u32 [#allocation3], 4
      %s492 = int_to_ptr.vmem [resolvable:$true] %s491
      %497 = dma.vmem_to_hbm [thread:$0]  %s492, 256, %s11, [#allocation4], 128, 128, 8
    $region49: #{tpu_custom_call.1} parent=1 // pred_fallthru
      _
    // Predicated region
    $region50: #{tpu_custom_call.1} parent=1 // pred_check
      _
    $region51: #{tpu_custom_call.1} parent=1 // pred_check_branch
      %499 = sbr.rel (0) target = $region53
    $region52: #{tpu_custom_call.1} parent=1 // pred_region
      %s501 = ssub.s32 256, 256
      %502 = vsyncadd [#allocation6], %s501
      %s503 = sshll.u32 [#allocation5], 4
      %s504 = int_to_ptr.vmem [resolvable:$true] %s503
      %509 = dma.vmem_to_hbm [thread:$0]  %s504, 256, %s12, [#allocation6], 128, 128, 8
    $region53: #{tpu_custom_call.1} parent=1 // pred_fallthru
      _
    // Predicated region
    $region54: #{tpu_custom_call.1} parent=1 // pred_check
      _
    $region55: #{tpu_custom_call.1} parent=1 // pred_check_branch
      %511 = sbr.rel (0) target = $region57
    $region56: #{tpu_custom_call.1} parent=1 // pred_region
      _
    $region57: #{tpu_custom_call.1} parent=1 // pred_fallthru
      _
    // Predicated region
    $region58: #{tpu_custom_call.1} parent=1 // pred_check
      _
    $region59: #{tpu_custom_call.1} parent=1 // pred_check_branch
      %513 = sbr.rel (0) target = $region61
    $region60: #{tpu_custom_call.1} parent=1 // pred_region
      %514 = dma.done [#allocation4], 256
    $region61: #{tpu_custom_call.1} parent=1 // pred_fallthru
      _
    // Predicated region
    $region62: #{tpu_custom_call.1} parent=1 // pred_check
      _
    $region63: #{tpu_custom_call.1} parent=1 // pred_check_branch
      %516 = sbr.rel (0) target = $region65
    $region64: #{tpu_custom_call.1} parent=1 // pred_region
      %517 = dma.done [#allocation6], 256
    $region65: #{tpu_custom_call.1} parent=1 // pred_fallthru
      _
    // Predicated region
    $region66: #{tpu_custom_call.1} parent=1 // pred_check
      _
    $region67: #{tpu_custom_call.1} parent=1 // pred_check_branch
      %519 = sbr.rel (0) target = $region69
    $region68: #{tpu_custom_call.1} parent=1 // pred_region
      _
    $region69: #{tpu_custom_call.1} parent=1 // pred_fallthru
      _
    %520 = vsyncpa [#allocation4], 1
    %521 = vsyncpa [#allocation6], 1

</llo_original>
